<compile_context>
chip_gen: v6e
topology: v6e:2x2x1
jax: 0.10.0
libtpu: 0.0.40
codegen_flags: <defaults>
</compile_context>

<pallas_src>
import functools

import jax
import jax.numpy as jnp
from jax import lax
from jax.experimental import pallas as pl
from jax.experimental.pallas import tpu as pltpu

_PAD_LOGIT = -1e4          # exp(-|pad|)=0, sigmoid(pad)=0, bce(pad,0)=0 -> adds 0 to every sum
_BLOCK_ELEMS = 2048 * 512  # ~4 MiB f32 per pipeline buffer (16 MiB total: 2 inputs x 2 buffers)
_CHUNK_ELEMS = 256 * 512   # in-kernel compute chunk: bounds live ranges / VMEM temporaries


def _round_up(a, b):
    return -(-a // b) * b


def _rows_cap(elems, lanes):
    return max(8, (elems // lanes) // 8 * 8)


def _bce_dice_kernel(x_ref, t_ref, out_ref, acc_ref, *, rows, block_rows, lanes,
                     row_tiles, chunk_rows):
    """grid = (samples, row_tiles); x_ref/t_ref blocks are (1, block_rows, lanes).

    acc_ref : (3, 8, lanes) f32 scratch; per-(sublane, lane) partial sums for the
              current sample: 0 = bce, 1 = sigmoid(x)*t, 2 = sigmoid(x)+t.
    out_ref : (1, 3, 8, lanes) per-sample output slab block, written once at the
              last row tile (single sublane/lane-dense store).
    """
    k = pl.program_id(1)

    @pl.when(k == 0)
    def _init():
        acc_ref[...] = jnp.zeros_like(acc_ref)

    def fold8(idx, q, n_rows):
        # Full-vreg accumulation: fold sublanes 8-at-a-time with plain VPU adds;
        # the final 8 -> 1 fold happens in the wrapper.
        if n_rows % 8 == 0:
            acc_ref[idx] += q.reshape(n_rows // 8, 8, lanes).sum(axis=0)
        else:  # tiny tile (< 8 valid rows): single cross-sublane reduce
            acc_ref[idx, :1, :] += jnp.sum(q, axis=0, keepdims=True)

    def chunk(start, n_rows):
        x = x_ref[0, pl.ds(start, n_rows), :].astype(jnp.float32)
        t = t_ref[0, pl.ds(start, n_rows), :].astype(jnp.float32)
        e = jnp.exp(-jnp.abs(x))            # one EUP exp shared by BCE and sigmoid
        den = 1.0 + e
        # Numerically stable BCE-with-logits: max(x,0) - x*t + log(1 + exp(-|x|)).
        bce = jnp.maximum(x, 0.0) - x * t + jnp.log(den)
        # sigmoid(x) from the same e; EUP approx reciprocal + 1 Newton step
        # (restores ~f32 accuracy) instead of an exact multi-op VALU divide.
        inv = pl.reciprocal(den, approx=True)
        inv = inv * (2.0 - den * inv)
        p = jnp.where(x >= 0.0, inv, e * inv)
        fold8(0, bce, n_rows)
        fold8(1, p * t, n_rows)
        fold8(2, p + t, n_rows)             # dice only ever needs sum(p) + sum(t)

    def accumulate(n_valid):
        # n_valid is static; loop over chunk_rows-sized sub-blocks so the
        # elementwise chain's intermediates stay bounded (v5e store-slot relief).
        n_full, rem = divmod(n_valid, chunk_rows)
        if n_full == 1 and rem == 0:
            chunk(0, chunk_rows)
        elif n_full > 0:
            def body(c, carry):
                chunk(pl.multiple_of(c * chunk_rows, chunk_rows), chunk_rows)
                return carry
            lax.fori_loop(0, n_full, body, 0, unroll=True)
        if rem:
            chunk(n_full * chunk_rows, rem)

    # The wrapper never pads the row axis, so the last row tile may cover fewer
    # than block_rows valid rows.  Restrict compute to the (static) valid row
    # count of that tile: no masks, no neutral fills, no garbage reads.
    last_valid = rows - (row_tiles - 1) * block_rows
    if last_valid == block_rows:
        accumulate(block_rows)
    else:
        @pl.when(k < row_tiles - 1)
        def _full_tile():
            accumulate(block_rows)

        @pl.when(k == row_tiles - 1)
        def _ragged_tile():
            accumulate(last_valid)

    @pl.when(k == row_tiles - 1)
    def _finalize():
        out_ref[0] = acc_ref[...]


def bce_dice_loss(preds, targets, weight_bce=0.5, weight_dice=0.5, *,
                  block_elems=_BLOCK_ELEMS, chunk_elems=_CHUNK_ELEMS):
    """preds: (N, C, H, W) logits; targets: (N, C, H, W) in {0, 1}.

    float32 or bfloat16 inputs are accepted as-is (bf16 halves HBM traffic and
    is exact for {0,1} targets); accumulation is float32 either way.  Inputs are
    intentionally NOT cast here (a wrapper cast would add an HBM round trip).
    """
    assert preds.shape == targets.shape
    N = preds.shape[0]
    D = 1
    for s in preds.shape[1:]:
        D *= int(s)

    # Lane width: largest power-of-two multiple of 128 dividing D, so the
    # (N, rows, lanes) view below is a free reshape (no padded HBM copy).
    lanes = 512
    while lanes > 128 and D % lanes:
        lanes //= 2

    x = preds.reshape(N, D)
    t = targets.reshape(N, D)
    rows = -(-D // lanes)
    pad = rows * lanes - D
    if pad:
        # Only the sub-row remainder (< lanes elements per sample) is ever
        # padded; the neutral values contribute exactly 0 to every sum.  The
        # row axis itself is never padded (ragged last tile handled in-kernel).
        x = jnp.pad(x, ((0, 0), (0, pad)), constant_values=_PAD_LOGIT)
        t = jnp.pad(t, ((0, 0), (0, pad)), constant_values=0.0)
    x3 = x.reshape(N, rows, lanes)
    t3 = t.reshape(N, rows, lanes)

    # Row tiling: row_tiles tiles of block_rows rows; overhang < 8*row_tiles rows
    # and is never read (kernel restricts the last tile to its valid rows).
    rows_cap = _rows_cap(block_elems, lanes)
    row_tiles = -(-rows // rows_cap)
    block_rows = rows if row_tiles == 1 else _round_up(-(-rows // row_tiles), 8)
    chunk_rows = _rows_cap(chunk_elems, lanes)

    kernel = functools.partial(
        _bce_dice_kernel, rows=rows, block_rows=block_rows, lanes=lanes,
        row_tiles=row_tiles, chunk_rows=chunk_rows)

    out = pl.pallas_call(
        kernel,
        out_shape=jax.ShapeDtypeStruct((N, 3, 8, lanes), jnp.float32),
        grid=(N, row_tiles),
        in_specs=[
            pl.BlockSpec((1, block_rows, lanes), lambda i, k: (i, k, 0)),
            pl.BlockSpec((1, block_rows, lanes), lambda i, k: (i, k, 0)),
        ],
        out_specs=pl.BlockSpec((1, 3, 8, lanes), lambda i, k: (i, 0, 0, 0)),
        scratch_shapes=[pltpu.VMEM((3, 8, lanes), jnp.float32)],
        compiler_params=pltpu.CompilerParams(
            dimension_semantics=("parallel", "arbitrary"),
            vmem_limit_bytes=40 * 1024 * 1024,
        ),
    )(x3, t3)

    # Tiny scalar glue in plain JAX: fold the (8, lanes) accumulators and apply
    # the smooth / mean / weighting terms.
    smooth = 1e-05
    bce_mean = jnp.sum(out[:, 0]) / (N * D)        # mean over real elements only
    inter = jnp.sum(out[:, 1], axis=(1, 2))        # per-sample sum sigmoid(x)*t
    p_plus_t = jnp.sum(out[:, 2], axis=(1, 2))     # per-sample sum sigmoid(x)+t
    dice = (2.0 * inter + smooth) / (p_plus_t + smooth)
    dice_loss = 1.0 - jnp.mean(dice)
    return weight_bce * bce_mean + weight_dice * dice_loss


def _reference(preds, targets, weight_bce=0.5, weight_dice=0.5):
    x = preds.astype(jnp.float32)
    t = targets.astype(jnp.float32)
    bce = jnp.mean(jnp.maximum(x, 0.0) - x * t + jnp.log1p(jnp.exp(-jnp.abs(x))))
    p = jax.nn.sigmoid(x)
    smooth = 1e-05
    inter = jnp.sum(p * t, axis=(1, 2, 3))
    dice = (2.0 * inter + smooth) / (
        jnp.sum(p, axis=(1, 2, 3)) + jnp.sum(t, axis=(1, 2, 3)) + smooth)
    return weight_bce * bce + weight_dice * (1.0 - jnp.mean(dice))


if __name__ == "__main__":
    key = jax.random.PRNGKey(0)
    k1, k2, k3, k4 = jax.random.split(key, 4)

    # Main example: (N, C, H, W) segmentation-style inputs.
    N, C, H, W = 2, 4, 16, 16
    preds = jax.random.normal(k1, (N, C, H, W), dtype=jnp.float32)
    targets = (jax.random.uniform(k2, (N, C, H, W)) > 0.5).astype(jnp.float32)

    loss = jax.block_until_ready(jax.jit(bce_dice_loss)(preds, targets))
    ref = _reference(preds, targets)
    assert jnp.allclose(loss, ref, atol=1e-5, rtol=1e-5), (loss, ref)

    # Exercise the multi-row-tile path (ragged last tile + inner chunk loop) at
    # small shapes by forcing tiny block/chunk sizes.
    preds2 = jax.random.normal(k3, (1, 4, 40, 64), dtype=jnp.float32)
    targets2 = (jax.random.uniform(k4, (1, 4, 40, 64)) > 0.5).astype(jnp.float32)
    small_fn = jax.jit(functools.partial(
        bce_dice_loss, block_elems=16 * 512, chunk_elems=8 * 512))
    loss2 = jax.block_until_ready(small_fn(preds2, targets2))
    ref2 = _reference(preds2, targets2)
    assert jnp.allclose(loss2, ref2, atol=1e-5, rtol=1e-5), (loss2, ref2)

    print("KERNEL_OK")
</pallas_src>

<mosaic_0001>
module attributes {stable_mosaic.version = 11 : i64} {
  func.func @_bce_dice_kernel(%arg0: i32, %arg1: i32, %arg2: memref<1x2x512xf32, #tpu.memory_space<vmem>>, %arg3: memref<1x2x512xf32, #tpu.memory_space<vmem>>, %arg4: memref<1x3x8x512xf32, #tpu.memory_space<vmem>>, %arg5: memref<3x8x512xf32, #tpu.memory_space<vmem>>) attributes {dimension_semantics = [#tpu.dimension_semantics<parallel>, #tpu.dimension_semantics<arbitrary>], iteration_bounds = array<i64: 2, 1>, scalar_prefetch = 0 : i64, scratch_operands = 1 : i64, tpu.core_type = #tpu.core_type<tc>, window_params = [{transform_indices = @transform_0, window_bounds = array<i64: 1, 2, 512>}, {transform_indices = @transform_1, window_bounds = array<i64: 1, 2, 512>}, {transform_indices = @transform_2, window_bounds = array<i64: 1, 3, 8, 512>}]} {
    %c0_i32 = arith.constant 0 : i32
    %0 = arith.cmpi eq, %arg1, %c0_i32 : i32
    %1 = arith.extui %0 : i1 to i32
    %c0_i32_0 = arith.constant 0 : i32
    %2 = arith.cmpi ne, %1, %c0_i32_0 : i32
    scf.if %2 {
      %cst_31 = arith.constant 0.000000e+00 : f32
      %57 = vector.broadcast %cst_31 : f32 to vector<3x8x512xf32>
      %c0_32 = arith.constant 0 : index
      %c0_33 = arith.constant 0 : index
      %c0_34 = arith.constant 0 : index
      %58 = vector.load %arg5[%c0_32, %c0_33, %c0_34] : memref<3x8x512xf32, #tpu.memory_space<vmem>>, vector<3x8x512xf32>
      tpu.vector_store %arg5[%c0_32, %c0_33, %c0_34], %57 {strides = array<i32>} : memref<3x8x512xf32, #tpu.memory_space<vmem>>, vector<3x8x512xf32>,
    } else {
    }
    %c0 = arith.constant 0 : index
    %c0_1 = arith.constant 0 : index
    %c0_2 = arith.constant 0 : index
    %3 = vector.load %arg2[%c0, %c0_1, %c0_2] : memref<1x2x512xf32, #tpu.memory_space<vmem>>, vector<1x2x512xf32>
    %4 = vector.shape_cast %3 : vector<1x2x512xf32> to vector<2x512xf32>
    %c0_3 = arith.constant 0 : index
    %c0_4 = arith.constant 0 : index
    %c0_5 = arith.constant 0 : index
    %5 = vector.load %arg3[%c0_3, %c0_4, %c0_5] : memref<1x2x512xf32, #tpu.memory_space<vmem>>, vector<1x2x512xf32>
    %6 = vector.shape_cast %5 : vector<1x2x512xf32> to vector<2x512xf32>
    %7 = math.absf %4 : vector<2x512xf32>
    %cst = arith.constant 0.000000e+00 : f32
    %8 = vector.broadcast %cst : f32 to vector<2x512xf32>
    %9 = arith.subf %8, %7 : vector<2x512xf32>
    %10 = math.exp %9 : vector<2x512xf32>
    %cst_6 = arith.constant 1.000000e+00 : f32
    %11 = vector.broadcast %cst_6 : f32 to vector<2x512xf32>
    %12 = arith.addf %11, %10 : vector<2x512xf32>
    %cst_7 = arith.constant 0.000000e+00 : f32
    %13 = vector.broadcast %cst_7 : f32 to vector<2x512xf32>
    %14 = arith.maximumf %4, %13 : vector<2x512xf32>
    %15 = arith.mulf %4, %6 : vector<2x512xf32>
    %16 = arith.subf %14, %15 : vector<2x512xf32>
    %17 = math.log %12 : vector<2x512xf32>
    %18 = arith.addf %16, %17 : vector<2x512xf32>
    %19 = tpu.reciprocal %12 {approx = true} : vector<2x512xf32> -> vector<2x512xf32>
    %20 = arith.mulf %12, %19 : vector<2x512xf32>
    %cst_8 = arith.constant 2.000000e+00 : f32
    %21 = vector.broadcast %cst_8 : f32 to vector<2x512xf32>
    %22 = arith.subf %21, %20 : vector<2x512xf32>
    %23 = arith.mulf %19, %22 : vector<2x512xf32>
    %cst_9 = arith.constant 0.000000e+00 : f32
    %24 = vector.broadcast %cst_9 : f32 to vector<2x512xf32>
    %25 = arith.cmpf oge, %4, %24 : vector<2x512xf32>
    %26 = arith.mulf %10, %23 : vector<2x512xf32>
    %27 = arith.select %25, %23, %26 : vector<2x512xi1>, vector<2x512xf32>
    %c0_10 = arith.constant 0 : index
    %c0_11 = arith.constant 0 : index
    %c0_12 = arith.constant 0 : index
    %28 = vector.load %arg5[%c0_10, %c0_11, %c0_12] : memref<3x8x512xf32, #tpu.memory_space<vmem>>, vector<1x1x512xf32>
    %29 = vector.shape_cast %28 : vector<1x1x512xf32> to vector<1x512xf32>
    %cst_13 = arith.constant dense<0.000000e+00> : vector<512xf32>
    %30 = vector.multi_reduction <add>, %18, %cst_13 [0] : vector<2x512xf32> to vector<512xf32>
    %31 = vector.shape_cast %30 : vector<512xf32> to vector<1x512xf32>
    %32 = arith.addf %29, %31 : vector<1x512xf32>
    %c0_14 = arith.constant 0 : index
    %c0_15 = arith.constant 0 : index
    %c0_16 = arith.constant 0 : index
    %33 = vector.load %arg5[%c0_14, %c0_15, %c0_16] : memref<3x8x512xf32, #tpu.memory_space<vmem>>, vector<1x1x512xf32>
    %34 = vector.shape_cast %33 : vector<1x1x512xf32> to vector<1x512xf32>
    %35 = vector.shape_cast %32 : vector<1x512xf32> to vector<1x1x512xf32>
    tpu.vector_store %arg5[%c0_14, %c0_15, %c0_16], %35 {strides = array<i32>} : memref<3x8x512xf32, #tpu.memory_space<vmem>>, vector<1x1x512xf32>,
    %36 = arith.mulf %27, %6 : vector<2x512xf32>
    %c1 = arith.constant 1 : index
    %c0_17 = arith.constant 0 : index
    %c0_18 = arith.constant 0 : index
    %37 = vector.load %arg5[%c1, %c0_17, %c0_18] : memref<3x8x512xf32, #tpu.memory_space<vmem>>, vector<1x1x512xf32>
    %38 = vector.shape_cast %37 : vector<1x1x512xf32> to vector<1x512xf32>
    %cst_19 = arith.constant dense<0.000000e+00> : vector<512xf32>
    %39 = vector.multi_reduction <add>, %36, %cst_19 [0] : vector<2x512xf32> to vector<512xf32>
    %40 = vector.shape_cast %39 : vector<512xf32> to vector<1x512xf32>
    %41 = arith.addf %38, %40 : vector<1x512xf32>
    %c1_20 = arith.constant 1 : index
    %c0_21 = arith.constant 0 : index
    %c0_22 = arith.constant 0 : index
    %42 = vector.load %arg5[%c1_20, %c0_21, %c0_22] : memref<3x8x512xf32, #tpu.memory_space<vmem>>, vector<1x1x512xf32>
    %43 = vector.shape_cast %42 : vector<1x1x512xf32> to vector<1x512xf32>
    %44 = vector.shape_cast %41 : vector<1x512xf32> to vector<1x1x512xf32>
    tpu.vector_store %arg5[%c1_20, %c0_21, %c0_22], %44 {strides = array<i32>} : memref<3x8x512xf32, #tpu.memory_space<vmem>>, vector<1x1x512xf32>,
    %45 = arith.addf %27, %6 : vector<2x512xf32>
    %c2 = arith.constant 2 : index
    %c0_23 = arith.constant 0 : index
    %c0_24 = arith.constant 0 : index
    %46 = vector.load %arg5[%c2, %c0_23, %c0_24] : memref<3x8x512xf32, #tpu.memory_space<vmem>>, vector<1x1x512xf32>
    %47 = vector.shape_cast %46 : vector<1x1x512xf32> to vector<1x512xf32>
    %cst_25 = arith.constant dense<0.000000e+00> : vector<512xf32>
    %48 = vector.multi_reduction <add>, %45, %cst_25 [0] : vector<2x512xf32> to vector<512xf32>
    %49 = vector.shape_cast %48 : vector<512xf32> to vector<1x512xf32>
    %50 = arith.addf %47, %49 : vector<1x512xf32>
    %c2_26 = arith.constant 2 : index
    %c0_27 = arith.constant 0 : index
    %c0_28 = arith.constant 0 : index
    %51 = vector.load %arg5[%c2_26, %c0_27, %c0_28] : memref<3x8x512xf32, #tpu.memory_space<vmem>>, vector<1x1x512xf32>
    %52 = vector.shape_cast %51 : vector<1x1x512xf32> to vector<1x512xf32>
    %53 = vector.shape_cast %50 : vector<1x512xf32> to vector<1x1x512xf32>
    tpu.vector_store %arg5[%c2_26, %c0_27, %c0_28], %53 {strides = array<i32>} : memref<3x8x512xf32, #tpu.memory_space<vmem>>, vector<1x1x512xf32>,
    %c0_i32_29 = arith.constant 0 : i32
    %54 = arith.cmpi eq, %arg1, %c0_i32_29 : i32
    %55 = arith.extui %54 : i1 to i32
    %c0_i32_30 = arith.constant 0 : i32
    %56 = arith.cmpi ne, %55, %c0_i32_30 : i32
    scf.if %56 {
      %c0_31 = arith.constant 0 : index
      %c0_32 = arith.constant 0 : index
      %c0_33 = arith.constant 0 : index
      %57 = vector.load %arg5[%c0_31, %c0_32, %c0_33] : memref<3x8x512xf32, #tpu.memory_space<vmem>>, vector<3x8x512xf32>
      %c0_34 = arith.constant 0 : index
      %c0_35 = arith.constant 0 : index
      %c0_36 = arith.constant 0 : index
      %c0_37 = arith.constant 0 : index
      %58 = vector.load %arg4[%c0_34, %c0_35, %c0_36, %c0_37] : memref<1x3x8x512xf32, #tpu.memory_space<vmem>>, vector<1x3x8x512xf32>
      %59 = vector.shape_cast %58 : vector<1x3x8x512xf32> to vector<3x8x512xf32>
      %60 = vector.shape_cast %57 : vector<3x8x512xf32> to vector<1x3x8x512xf32>
      tpu.vector_store %arg4[%c0_34, %c0_35, %c0_36, %c0_37], %60 {strides = array<i32>} : memref<1x3x8x512xf32, #tpu.memory_space<vmem>>, vector<1x3x8x512xf32>,
    } else {
    }
    return
  }
  func.func @transform_0(%arg0: i32, %arg1: i32) -> (i32, i32, i32) {
    %c0_i32 = arith.constant 0 : i32
    %c0_i32_0 = arith.constant 0 : i32
    return %arg0, %arg1, %c0_i32 : i32, i32, i32
  }
  func.func @transform_1(%arg0: i32, %arg1: i32) -> (i32, i32, i32) {
    %c0_i32 = arith.constant 0 : i32
    %c0_i32_0 = arith.constant 0 : i32
    return %arg0, %arg1, %c0_i32 : i32, i32, i32
  }
  func.func @transform_2(%arg0: i32, %arg1: i32) -> (i32, i32, i32, i32) {
    %c0_i32 = arith.constant 0 : i32
    %c0_i32_0 = arith.constant 0 : i32
    %c0_i32_1 = arith.constant 0 : i32
    %c0_i32_2 = arith.constant 0 : i32
    return %arg0, %c0_i32, %c0_i32_0, %c0_i32_1 : i32, i32, i32, i32
  }
}

</mosaic_0001>

<llo_original>
// kernel: bce_dice_loss.1
$region0: #{bce_dice_loss.1}
  #allocation0 [shape = 'u32[]', space=smem, size = 0x4, offset = 0x4, fixed_abs, tag = 'smem constant byte address 0x4 - core index']
  #allocation1 [shape = 'u32[144,128]{1,0:T(1,128)}', space=vmem, size = 0x12000, scoped, tag = 'internal scratch']
  #allocation2 [shape = 'f32[3,8,512]{2,1,0:T(8,128)}', space=vmem, size = 0xc000, scoped, tag = 'scratch operand']
  %s0 = inlined_call_operand.vmem [shape: f32[2,2,512], index: 0, kind: input, shape index: {}]
  %s1 = inlined_call_operand.vmem [shape: f32[2,2,512], index: 1, kind: input, shape index: {}]
  %s2 = inlined_call_operand.vmem [shape: f32[2,3,8,512], index: 2, kind: output, shape index: {}]
  %s3 = sld [smem:[#allocation0]]
  $region49: #{bce_dice_loss.1} parent=0
    _
  %s5 = ssub.s32 1, %s3
  %s6 = scalar_select 0, %s5, %s3
  loop: start=0, step=1, limit=4
  $region2: #{bce_dice_loss.1} parent=0 // loop_pre_header
    _
  $region3: #{bce_dice_loss.1} parent=0 // loop_header
    %s8 = sphi 0, %s12
    %p9 = scmp.ge.s32.totalorder %s8, 4
    %s15 = sphi 0, %s27
    %s16 = sphi 0, %s23
    %s17 = sphi 0, %s15
    %s18 = sphi 0, %s16
    %s19 = sphi 0, %s17
    %s20 = sphi 0, %s18
    %s32 = sphi 0, %s34
    %s35 = sphi 0, %s32
    %s36 = sphi 0, %s35
    %s52 = sphi 0, %s36
    %s60 = sphi 0, %s62
    %s63 = sphi 0, %s60
    %s64 = sphi 0, %s63
    %s80 = sphi 0, %s64
    %s86 = sphi 0, %s88
    %s89 = sphi 0, %s86
    %s90 = sphi 0, %s89
    %s106 = sphi 0, %s90
  $region4: #{bce_dice_loss.1} parent=0 // loop_header_branch
    %11 = sbr.rel (%p9) target = $region8
  $region5: #{bce_dice_loss.1} parent=0 // loop_body
    %s13 = ssub.s32 %s8, 1
    %s14 = ssub.s32 %s8, 2
    %s21 = sadd.s32 1, %s16
    %p22 = scmp.ge.s32.totalorder %s21, 1
    %s23 = scalar_select %p22, 0, %s21
    %s24 = sadd.s32 1, %s15
    %s25 = scalar_select %p22, %s24, %s15
    %p26 = scmp.ge.s32.totalorder %s25, 2
    %s27 = scalar_select %p26, 0, %s25
    %s28 = ssub.s32 %s15, %s27
    %s29 = ssub.s32 %s16, %s23
    %s30 = sor.u32 %s28, %s29
    %p31 = scmp.eq.s32.totalorder %s30, 0
    %s33 = sadd.s32 %s32, 1
    %s34 = scalar_select %p31, %s32, %s33
    %p37 = pneg %p31
    %p38 = scmp.eq.s32.totalorder %s8, 1
    %p39 = por %p37, %p38
    %p40 = scmp.ne.s32.totalorder %s32, %s35
    %p41 = scmp.eq.s32.totalorder %s8, 0
    %p42 = por %p40, %p41
    %p43 = scmp.ne.s32.totalorder %s32, %s35
    %p44 = scmp.eq.s32.totalorder %s13, 1
    %p45 = por %p43, %p44
    %p46 = scmp.ne.s32.totalorder %s35, %s36
    %p47 = scmp.eq.s32.totalorder %s13, 0
    %p48 = por %p46, %p47
    %p49 = scmp.ne.s32.totalorder %s35, %s36
    %p50 = scmp.eq.s32.totalorder %s14, 1
    %p51 = por %p49, %p50
    %p53 = scmp.ne.s32.totalorder %s36, %s52
    %p54 = scmp.eq.s32.totalorder %s14, 0
    %p55 = por %p53, %p54
    %s56 = ssub.s32 %s15, %s27
    %s57 = ssub.s32 %s16, %s23
    %s58 = sor.u32 %s56, %s57
    %p59 = scmp.eq.s32.totalorder %s58, 0
    %s61 = sadd.s32 %s60, 1
    %s62 = scalar_select %p59, %s60, %s61
    %p65 = pneg %p59
    %p66 = scmp.eq.s32.totalorder %s8, 1
    %p67 = por %p65, %p66
    %p68 = scmp.ne.s32.totalorder %s60, %s63
    %p69 = scmp.eq.s32.totalorder %s8, 0
    %p70 = por %p68, %p69
    %p71 = scmp.ne.s32.totalorder %s60, %s63
    %p72 = scmp.eq.s32.totalorder %s13, 1
    %p73 = por %p71, %p72
    %p74 = scmp.ne.s32.totalorder %s63, %s64
    %p75 = scmp.eq.s32.totalorder %s13, 0
    %p76 = por %p74, %p75
    %p77 = scmp.ne.s32.totalorder %s63, %s64
    %p78 = scmp.eq.s32.totalorder %s14, 1
    %p79 = por %p77, %p78
    %p81 = scmp.ne.s32.totalorder %s64, %s80
    %p82 = scmp.eq.s32.totalorder %s14, 0
    %p83 = por %p81, %p82
    %s84 = ssub.s32 %s15, %s27
    %p85 = scmp.eq.s32.totalorder %s84, 0
    %s87 = sadd.s32 %s86, 1
    %s88 = scalar_select %p85, %s86, %s87
    %p91 = pneg %p85
    %p92 = scmp.eq.s32.totalorder %s8, 1
    %p93 = por %p91, %p92
    %p94 = scmp.ne.s32.totalorder %s86, %s89
    %p95 = scmp.eq.s32.totalorder %s8, 0
    %p96 = por %p94, %p95
    %p97 = scmp.ne.s32.totalorder %s86, %s89
    %p98 = scmp.eq.s32.totalorder %s13, 1
    %p99 = por %p97, %p98
    %p100 = scmp.ne.s32.totalorder %s89, %s90
    %p101 = scmp.eq.s32.totalorder %s13, 0
    %p102 = por %p100, %p101
    %p103 = scmp.ne.s32.totalorder %s89, %s90
    %p104 = scmp.eq.s32.totalorder %s14, 1
    %p105 = por %p103, %p104
    %p107 = scmp.ne.s32.totalorder %s90, %s106
    %p108 = scmp.eq.s32.totalorder %s14, 0
    %p109 = por %p107, %p108
    %p110 = scmp.le.s32.totalorder 1, %s8
    %p111 = scmp.lt.s32.totalorder %s8, 3
    %p112 = pnand %p110, %p111
    %p113 = pneg %p112
    // Predicated region
    $region9: #{bce_dice_loss.1} parent=5 // pred_check
      _
    $region10: #{bce_dice_loss.1} parent=5 // pred_check_branch
      %115 = sbr.rel (%p112) target = $region12
    $region11: #{bce_dice_loss.1} parent=5 // pred_region
      %s116 = ssub.s32 %s8, 1
    $region12: #{bce_dice_loss.1} parent=5 // pred_fallthru
      _
    %p117 = scmp.lt.s32.totalorder %s8, 2
    // Predicated region
    $region13: #{bce_dice_loss.1} parent=5 // pred_check
      %p118 = pneg %p117
    $region14: #{bce_dice_loss.1} parent=5 // pred_check_branch
      %120 = sbr.rel (%p118) target = $region16
    $region15: #{bce_dice_loss.1} parent=5 // pred_region
      // Predicated region
      $region17: #{bce_dice_loss.1} parent=15 // pred_check
        %p121 = pneg %p42
      $region18: #{bce_dice_loss.1} parent=15 // pred_check_branch
        %123 = sbr.rel (%p121) target = $region20
      $region19: #{bce_dice_loss.1} parent=15 // pred_region
        %p124 = scmp.lt.s32.totalorder %s15, 1
        %s125 = scalar_select %p124, %s15, 1
        %p126 = scmp.lt.s32.totalorder %s16, 0
        %s127 = scalar_select %p126, %s16, 0
        %s128 = smul.addr %s127, 4
        %s129 = smul.addr %s125, 4
        %s130 = sadd.s32 %s128, %s129
        %s131 = smul.addr %s130, 2
        %s132 = scalar_lea.vmem %s0, %s131
      $region20: #{bce_dice_loss.1} parent=15 // pred_fallthru
        _
      // Predicated region
      $region21: #{bce_dice_loss.1} parent=15 // pred_check
        %p133 = pneg %p70
      $region22: #{bce_dice_loss.1} parent=15 // pred_check_branch
        %135 = sbr.rel (%p133) target = $region24
      $region23: #{bce_dice_loss.1} parent=15 // pred_region
        %p136 = scmp.lt.s32.totalorder %s15, 1
        %s137 = scalar_select %p136, %s15, 1
        %p138 = scmp.lt.s32.totalorder %s16, 0
        %s139 = scalar_select %p138, %s16, 0
        %s140 = smul.addr %s139, 4
        %s141 = smul.addr %s137, 4
        %s142 = sadd.s32 %s140, %s141
        %s143 = smul.addr %s142, 2
        %s144 = scalar_lea.vmem %s1, %s143
      $region24: #{bce_dice_loss.1} parent=15 // pred_fallthru
        _
    $region16: #{bce_dice_loss.1} parent=5 // pred_fallthru
      _
    %p145 = scmp.le.s32.totalorder 1, %s8
    %p146 = scmp.lt.s32.totalorder %s8, 3
    %p147 = pnand %p145, %p146
    %p148 = pneg %p147
    // Predicated region
    $region25: #{bce_dice_loss.1} parent=5 // pred_check
      _
    $region26: #{bce_dice_loss.1} parent=5 // pred_check_branch
      %150 = sbr.rel (%p147) target = $region28
    $region27: #{bce_dice_loss.1} parent=5 // pred_region
      %s151 = ssub.s32 %s8, 1
      %p152 = scmp.lt.s32.totalorder %s17, 1
      %s153 = scalar_select %p152, %s17, 1
      %p154 = scmp.lt.s32.totalorder %s18, 0
      %s155 = scalar_select %p154, %s18, 0
      %s156 = smul.addr %s155, 4
      %s157 = smul.addr %s153, 4
      %s158 = sadd.s32 %s156, %s157
      %s159 = smul.addr %s158, 2
      %s160 = scalar_lea.vmem %s0, %s159
      %p161 = pneg %p48
      %p162 = pneg %p45
      %p163 = scmp.lt.s32.totalorder %s17, 1
      %s164 = scalar_select %p163, %s17, 1
      %p165 = scmp.lt.s32.totalorder %s18, 0
      %s166 = scalar_select %p165, %s18, 0
      %s167 = smul.addr %s166, 4
      %s168 = smul.addr %s164, 4
      %s169 = sadd.s32 %s167, %s168
      %s170 = smul.addr %s169, 2
      %s171 = scalar_lea.vmem %s1, %s170
      %p172 = pneg %p76
      %p173 = pneg %p73
      %p174 = pneg %p102
      %p175 = pneg %p99
      %p176 = scmp.lt.s32.totalorder %s17, 1
      %s177 = scalar_select %p176, %s17, 1
      %s178 = smul.addr %s177, 12
      %s179 = smul.addr %s178, 8
      %s180 = scalar_lea.vmem %s2, %s179
      %p181 = scmp.lt.s32.totalorder %s17, 1
      %s182 = scalar_select %p181, %s17, 1
      %p183 = scmp.lt.s32.totalorder %s18, 0
      %s184 = scalar_select %p183, %s18, 0
      %s185 = smul.addr %s184, 4
      %s186 = smul.addr %s182, 4
      %s187 = sadd.s32 %s185, %s186
      %s188 = smul.addr %s187, 2
      %s189 = scalar_lea.vmem %s0, %s188
      %p190 = scmp.lt.s32.totalorder %s17, 1
      %s191 = scalar_select %p190, %s17, 1
      %p192 = scmp.lt.s32.totalorder %s18, 0
      %s193 = scalar_select %p192, %s18, 0
      %s194 = smul.addr %s193, 4
      %s195 = smul.addr %s191, 4
      %s196 = sadd.s32 %s194, %s195
      %s197 = smul.addr %s196, 2
      %s198 = scalar_lea.vmem %s1, %s197
      %p199 = scmp.lt.s32.totalorder %s17, 1
      %s200 = scalar_select %p199, %s17, 1
      %s201 = smul.addr %s200, 12
      %s202 = smul.addr %s201, 8
      %s203 = scalar_lea.vmem %s2, %s202
      %p204 = scmp.eq.s32.totalorder %s18, 0
      // Predicated region
      $region29: #{bce_dice_loss.1} parent=27 // pred_check
        %p205 = pneg %p204
      $region30: #{bce_dice_loss.1} parent=27 // pred_check_branch
        %207 = sbr.rel (%p205) target = $region32
      $region31: #{bce_dice_loss.1} parent=27 // pred_region
        %208 = vst [vmem:[#allocation2] sm:$0xff] 0.0
        %209 = vst [vmem:[#allocation2 + $0x8] sm:$0xff] 0.0
        %210 = vst [vmem:[#allocation2 + $0x10] sm:$0xff] 0.0
        %211 = vst [vmem:[#allocation2 + $0x18] sm:$0xff] 0.0
        %212 = vst [vmem:[#allocation2 + $0x20] sm:$0xff] 0.0
        %213 = vst [vmem:[#allocation2 + $0x28] sm:$0xff] 0.0
        %214 = vst [vmem:[#allocation2 + $0x30] sm:$0xff] 0.0
        %215 = vst [vmem:[#allocation2 + $0x38] sm:$0xff] 0.0
        %216 = vst [vmem:[#allocation2 + $0x40] sm:$0xff] 0.0
        %217 = vst [vmem:[#allocation2 + $0x48] sm:$0xff] 0.0
        %218 = vst [vmem:[#allocation2 + $0x50] sm:$0xff] 0.0
        %219 = vst [vmem:[#allocation2 + $0x58] sm:$0xff] 0.0
      $region32: #{bce_dice_loss.1} parent=27 // pred_fallthru
        _
      %v220 = vld [vmem:[%s189] sm:$0xff]
      %v221 = vld [vmem:[%s198] sm:$0xff]
      %v222 = vand.u32 2147483647, %v220
      %v223 = vsub.f32 0.0, %v222
      %v224 = vmul.f32 %v223, 1.442695
      %v225 = vpow.pop %v224
      %v226 = vadd.f32 %v225, 1.0
      %v227 = vmax.f32 %v220, 0.0
      %v228 = vmul.f32 %v220, %v221
      %v229 = vsub.f32 %v227, %v228
      %v230 = vlog2.pop %v226
      %v231 = vmul.f32 %v230, 0.6931472
      %v232 = vadd.f32 %v229, %v231
      %v233 = vrcp.pop %v226
      %v234 = vmul.f32 %v226, %v233
      %v235 = vsub.f32 2.0, %v234
      %v236 = vmul.f32 %v233, %v235
      %vm237 = vcmp.ge.f32.partialorder %v220, 0.0
      %v238 = vmul.f32 %v225, %v236
      %v239 = vsel %vm237, %v236, %v238
      %v240 = vld [vmem:[#allocation2] ss:$8 sm:$0xf]
      %v242 = vcombine.high %v232, %v232
      %v244 = vunpack.c.l.s4 1983009808
      %v245 = vunpack.c.0.s8 %v244
      %v246 = vlaneseq
      %v247 = vshrl.u32 %v246, 7
      %v248 = vsub.s32 %v245, %v247
      %v249 = vrot.slane %v232, %v248
      %v251 = vunpack.c.l.s4 1983009808
      %v252 = vunpack.c.0.s8 %v251
      %v253 = vlaneseq
      %v254 = vshrl.u32 %v253, 7
      %v255 = vsub.s32 %v252, %v254
      %v256 = vrot.slane %v242, %v255
      %v257 = vcombine.high %v249, %v249
      %v258 = vcombine.high %v256, %v256
      %vm263 = vcmask 1041408
      %v264 = vsel %vm263, %v249, 0.0
      %v265 = vrot.slane %v264, 4
      %v266 = vadd.f32 %v264, %v265
      %v267 = vrot.slane %v266, 2
      %v268 = vadd.f32 %v266, %v267
      %v269 = vrot.slane %v268, 1
      %v270 = vadd.f32 %v268, %v269
      %v271 = vsel %vm263, %v257, 0.0
      %v272 = vrot.slane %v271, 4
      %v273 = vadd.f32 %v271, %v272
      %v274 = vrot.slane %v273, 2
      %v275 = vadd.f32 %v273, %v274
      %v276 = vrot.slane %v275, 1
      %v277 = vadd.f32 %v275, %v276
      %v278 = vsel %vm263, %v256, 0.0
      %v279 = vrot.slane %v278, 4
      %v280 = vadd.f32 %v278, %v279
      %v281 = vrot.slane %v280, 2
      %v282 = vadd.f32 %v280, %v281
      %v283 = vrot.slane %v282, 1
      %v284 = vadd.f32 %v282, %v283
      %v285 = vsel %vm263, %v258, 0.0
      %v286 = vrot.slane %v285, 4
      %v287 = vadd.f32 %v285, %v286
      %v288 = vrot.slane %v287, 2
      %v289 = vadd.f32 %v287, %v288
      %v290 = vrot.slane %v289, 1
      %v291 = vadd.f32 %v289, %v290
      %v296 = vcombine.low %v270, %v277
      %v297 = vcombine.low %v284, %v291
      %v299 = vunpack.c.l.s4 1966171168
      %v300 = vunpack.c.0.s8 %v299
      %v301 = vlaneseq
      %v302 = vshrl.u32 %v301, 7
      %v303 = vsub.s32 %v300, %v302
      %v304 = vrot.slane %v296, %v303
      %v306 = vunpack.c.l.s4 1966171168
      %v307 = vunpack.c.0.s8 %v306
      %v308 = vlaneseq
      %v309 = vshrl.u32 %v308, 7
      %v310 = vsub.s32 %v307, %v309
      %v311 = vrot.slane %v297, %v310
      %v312 = vcombine.low %v304, %v311
      %v314 = vunpack.c.l.s4 1966171168
      %v315 = vunpack.c.0.s8 %v314
      %v316 = vlaneseq
      %v317 = vshrl.u32 %v316, 7
      %v318 = vsub.s32 %v315, %v317
      %v319 = vrot.slane %v312, %v318
      %v321 = vadd.f32 %v240, %v319
      %v322 = vlaneseq
      %vm323 = vcmp.ge.s32.totalorder %v322, 0
      %vm324 = vcmp.lt.s32.totalorder %v322, 512
      %vm325 = vmand %vm323, %vm324
      %326 = vst.msk [vmem:[#allocation2] ss:$8 sm:$0xf] %vm325, %v321
      %327 = vst.msk [vmem:[#allocation2] ss:$8 sm:$0x0] %vm325, %v321
      %v328 = vmul.f32 %v239, %v221
      %s329 = scalar_lea.vmem [#allocation2], 32
      %v330 = vld [vmem:[%s329] ss:$8 sm:$0xf]
      %v332 = vcombine.high %v328, %v328
      %v334 = vunpack.c.l.s4 1983009808
      %v335 = vunpack.c.0.s8 %v334
      %v336 = vlaneseq
      %v337 = vshrl.u32 %v336, 7
      %v338 = vsub.s32 %v335, %v337
      %v339 = vrot.slane %v328, %v338
      %v341 = vunpack.c.l.s4 1983009808
      %v342 = vunpack.c.0.s8 %v341
      %v343 = vlaneseq
      %v344 = vshrl.u32 %v343, 7
      %v345 = vsub.s32 %v342, %v344
      %v346 = vrot.slane %v332, %v345
      %v347 = vcombine.high %v339, %v339
      %v348 = vcombine.high %v346, %v346
      %v353 = vsel %vm263, %v339, 0.0
      %v354 = vrot.slane %v353, 4
      %v355 = vadd.f32 %v353, %v354
      %v356 = vrot.slane %v355, 2
      %v357 = vadd.f32 %v355, %v356
      %v358 = vrot.slane %v357, 1
      %v359 = vadd.f32 %v357, %v358
      %v360 = vsel %vm263, %v347, 0.0
      %v361 = vrot.slane %v360, 4
      %v362 = vadd.f32 %v360, %v361
      %v363 = vrot.slane %v362, 2
      %v364 = vadd.f32 %v362, %v363
      %v365 = vrot.slane %v364, 1
      %v366 = vadd.f32 %v364, %v365
      %v367 = vsel %vm263, %v346, 0.0
      %v368 = vrot.slane %v367, 4
      %v369 = vadd.f32 %v367, %v368
      %v370 = vrot.slane %v369, 2
      %v371 = vadd.f32 %v369, %v370
      %v372 = vrot.slane %v371, 1
      %v373 = vadd.f32 %v371, %v372
      %v374 = vsel %vm263, %v348, 0.0
      %v375 = vrot.slane %v374, 4
      %v376 = vadd.f32 %v374, %v375
      %v377 = vrot.slane %v376, 2
      %v378 = vadd.f32 %v376, %v377
      %v379 = vrot.slane %v378, 1
      %v380 = vadd.f32 %v378, %v379
      %v385 = vcombine.low %v359, %v366
      %v386 = vcombine.low %v373, %v380
      %v388 = vunpack.c.l.s4 1966171168
      %v389 = vunpack.c.0.s8 %v388
      %v390 = vlaneseq
      %v391 = vshrl.u32 %v390, 7
      %v392 = vsub.s32 %v389, %v391
      %v393 = vrot.slane %v385, %v392
      %v395 = vunpack.c.l.s4 1966171168
      %v396 = vunpack.c.0.s8 %v395
      %v397 = vlaneseq
      %v398 = vshrl.u32 %v397, 7
      %v399 = vsub.s32 %v396, %v398
      %v400 = vrot.slane %v386, %v399
      %v401 = vcombine.low %v393, %v400
      %v403 = vunpack.c.l.s4 1966171168
      %v404 = vunpack.c.0.s8 %v403
      %v405 = vlaneseq
      %v406 = vshrl.u32 %v405, 7
      %v407 = vsub.s32 %v404, %v406
      %v408 = vrot.slane %v401, %v407
      %v410 = vadd.f32 %v330, %v408
      %411 = vst.msk [vmem:[%s329] ss:$8 sm:$0xf] %vm325, %v410
      %412 = vst.msk [vmem:[%s329] ss:$8 sm:$0x0] %vm325, %v410
      %v413 = vadd.f32 %v239, %v221
      %s414 = scalar_lea.vmem [#allocation2], 64
      %v415 = vld [vmem:[%s414] ss:$8 sm:$0xf]
      %v417 = vcombine.high %v413, %v413
      %v419 = vunpack.c.l.s4 1983009808
      %v420 = vunpack.c.0.s8 %v419
      %v421 = vlaneseq
      %v422 = vshrl.u32 %v421, 7
      %v423 = vsub.s32 %v420, %v422
      %v424 = vrot.slane %v413, %v423
      %v426 = vunpack.c.l.s4 1983009808
      %v427 = vunpack.c.0.s8 %v426
      %v428 = vlaneseq
      %v429 = vshrl.u32 %v428, 7
      %v430 = vsub.s32 %v427, %v429
      %v431 = vrot.slane %v417, %v430
      %v432 = vcombine.high %v424, %v424
      %v433 = vcombine.high %v431, %v431
      %v438 = vsel %vm263, %v424, 0.0
      %v439 = vrot.slane %v438, 4
      %v440 = vadd.f32 %v438, %v439
      %v441 = vrot.slane %v440, 2
      %v442 = vadd.f32 %v440, %v441
      %v443 = vrot.slane %v442, 1
      %v444 = vadd.f32 %v442, %v443
      %v445 = vsel %vm263, %v432, 0.0
      %v446 = vrot.slane %v445, 4
      %v447 = vadd.f32 %v445, %v446
      %v448 = vrot.slane %v447, 2
      %v449 = vadd.f32 %v447, %v448
      %v450 = vrot.slane %v449, 1
      %v451 = vadd.f32 %v449, %v450
      %v452 = vsel %vm263, %v431, 0.0
      %v453 = vrot.slane %v452, 4
      %v454 = vadd.f32 %v452, %v453
      %v455 = vrot.slane %v454, 2
      %v456 = vadd.f32 %v454, %v455
      %v457 = vrot.slane %v456, 1
      %v458 = vadd.f32 %v456, %v457
      %v459 = vsel %vm263, %v433, 0.0
      %v460 = vrot.slane %v459, 4
      %v461 = vadd.f32 %v459, %v460
      %v462 = vrot.slane %v461, 2
      %v463 = vadd.f32 %v461, %v462
      %v464 = vrot.slane %v463, 1
      %v465 = vadd.f32 %v463, %v464
      %v470 = vcombine.low %v444, %v451
      %v471 = vcombine.low %v458, %v465
      %v473 = vunpack.c.l.s4 1966171168
      %v474 = vunpack.c.0.s8 %v473
      %v475 = vlaneseq
      %v476 = vshrl.u32 %v475, 7
      %v477 = vsub.s32 %v474, %v476
      %v478 = vrot.slane %v470, %v477
      %v480 = vunpack.c.l.s4 1966171168
      %v481 = vunpack.c.0.s8 %v480
      %v482 = vlaneseq
      %v483 = vshrl.u32 %v482, 7
      %v484 = vsub.s32 %v481, %v483
      %v485 = vrot.slane %v471, %v484
      %v486 = vcombine.low %v478, %v485
      %v488 = vunpack.c.l.s4 1966171168
      %v489 = vunpack.c.0.s8 %v488
      %v490 = vlaneseq
      %v491 = vshrl.u32 %v490, 7
      %v492 = vsub.s32 %v489, %v491
      %v493 = vrot.slane %v486, %v492
      %v495 = vadd.f32 %v415, %v493
      %496 = vst.msk [vmem:[%s414] ss:$8 sm:$0xf] %vm325, %v495
      %497 = vst.msk [vmem:[%s414] ss:$8 sm:$0x0] %vm325, %v495
      // Predicated region
      $region33: #{bce_dice_loss.1} parent=27 // pred_check
        %p498 = pneg %p204
      $region34: #{bce_dice_loss.1} parent=27 // pred_check_branch
        %500 = sbr.rel (%p498) target = $region36
      $region35: #{bce_dice_loss.1} parent=27 // pred_region
        %v501 = vld [vmem:[#allocation2] sm:$0xff]
        %v502 = vld [vmem:[#allocation2 + $0x8] sm:$0xff]
        %v503 = vld [vmem:[#allocation2 + $0x10] sm:$0xff]
        %v504 = vld [vmem:[#allocation2 + $0x18] sm:$0xff]
        %v505 = vld [vmem:[#allocation2 + $0x20] sm:$0xff]
        %v506 = vld [vmem:[#allocation2 + $0x28] sm:$0xff]
        %v507 = vld [vmem:[#allocation2 + $0x30] sm:$0xff]
        %v508 = vld [vmem:[#allocation2 + $0x38] sm:$0xff]
        %v509 = vld [vmem:[#allocation2 + $0x40] sm:$0xff]
        %v510 = vld [vmem:[#allocation2 + $0x48] sm:$0xff]
        %v511 = vld [vmem:[#allocation2 + $0x50] sm:$0xff]
        %v512 = vld [vmem:[#allocation2 + $0x58] sm:$0xff]
        %513 = vst [vmem:[%s203] sm:$0xff] %v501
        %514 = vst [vmem:[%s203 + $0x8] sm:$0xff] %v502
        %515 = vst [vmem:[%s203 + $0x10] sm:$0xff] %v503
        %516 = vst [vmem:[%s203 + $0x18] sm:$0xff] %v504
        %517 = vst [vmem:[%s203 + $0x20] sm:$0xff] %v505
        %518 = vst [vmem:[%s203 + $0x28] sm:$0xff] %v506
        %519 = vst [vmem:[%s203 + $0x30] sm:$0xff] %v507
        %520 = vst [vmem:[%s203 + $0x38] sm:$0xff] %v508
        %521 = vst [vmem:[%s203 + $0x40] sm:$0xff] %v509
        %522 = vst [vmem:[%s203 + $0x48] sm:$0xff] %v510
        %523 = vst [vmem:[%s203 + $0x50] sm:$0xff] %v511
        %524 = vst [vmem:[%s203 + $0x58] sm:$0xff] %v512
      $region36: #{bce_dice_loss.1} parent=27 // pred_fallthru
        _
      %p525 = scmp.lt.s32.totalorder %s17, 1
      %s526 = scalar_select %p525, %s17, 1
      %s527 = smul.addr %s526, 12
      %s528 = smul.addr %s527, 8
      %s529 = scalar_lea.vmem %s2, %s528
      // Predicated region
      $region37: #{bce_dice_loss.1} parent=27 // pred_check
        %p530 = pneg %p99
      $region38: #{bce_dice_loss.1} parent=27 // pred_check_branch
        %532 = sbr.rel (%p530) target = $region40
      $region39: #{bce_dice_loss.1} parent=27 // pred_region
        _
      $region40: #{bce_dice_loss.1} parent=27 // pred_fallthru
        _
    $region28: #{bce_dice_loss.1} parent=5 // pred_fallthru
      _
    %p533 = scmp.le.s32.totalorder 2, %s8
    // Predicated region
    $region41: #{bce_dice_loss.1} parent=5 // pred_check
      %p534 = pneg %p533
    $region42: #{bce_dice_loss.1} parent=5 // pred_check_branch
      %536 = sbr.rel (%p534) target = $region44
    $region43: #{bce_dice_loss.1} parent=5 // pred_region
      %s537 = ssub.s32 %s8, 2
      // Predicated region
      $region45: #{bce_dice_loss.1} parent=43 // pred_check
        %p538 = pneg %p105
      $region46: #{bce_dice_loss.1} parent=43 // pred_check_branch
        %540 = sbr.rel (%p538) target = $region48
      $region47: #{bce_dice_loss.1} parent=43 // pred_region
        %p541 = scmp.lt.s32.totalorder %s19, 1
        %s542 = scalar_select %p541, %s19, 1
        %s543 = smul.addr %s542, 12
        %s544 = smul.addr %s543, 8
        %s545 = scalar_lea.vmem %s2, %s544
      $region48: #{bce_dice_loss.1} parent=43 // pred_fallthru
        _
    $region44: #{bce_dice_loss.1} parent=5 // pred_fallthru
      _
  $region6: #{bce_dice_loss.1} parent=0 // loop_footer
    %s12 = sadd.s32 1, %s8
  $region7: #{bce_dice_loss.1} parent=0 // loop_footer_branch
    %7 = sbr.rel target = $region3
  $region8: #{bce_dice_loss.1} parent=0 // loop_exit
    _

</llo_original>
